<compile_context>
chip_gen: v6e
topology: v6e:2x2x1
jax: 0.10.0
libtpu: 0.0.40
codegen_flags: <defaults>
</compile_context>

<pallas_src>
import jax
import jax.numpy as jnp
from jax.experimental import pallas as pl
from jax.experimental.pallas import tpu as pltpu

LANE = 128
SUBPACK = 32  # sublane multiple that is safe for int8-packed blocks


def _cdiv(a, b):
    return (a + b - 1) // b


def _round_up(n, m):
    return _cdiv(n, m) * m


def _gender_cls_loss_kernel(out_ref, gt_ref, num_ref, den_ref):
    # out_ref: (2, T, 128) probs (input dtype), gt_ref: (T, 128) int8 labels.
    # num_ref/den_ref: (1, 8, 128) f32 partial accumulators, resident across the
    # "arbitrary" grid axis (same output block index for every j).
    @pl.when(pl.program_id(1) == 0)
    def _():
        num_ref[...] = jnp.zeros_like(num_ref)
        den_ref[...] = jnp.zeros_like(den_ref)

    g = gt_ref[...].astype(jnp.int32)            # (T, 128)
    x0 = out_ref[0].astype(jnp.float32)          # (T, 128) prob of class 1
    x1 = out_ref[1].astype(jnp.float32)          # (T, 128) prob of class 2

    # Single-log BCE: y is exactly one-hot, so
    #   -(y*log(x) + (1-y)*log(1-x))  ==  -max(log(where(y, x, 1-x)), -100)
    # (bit-equivalent to PyTorch's BCELoss with its -100 log clamp).
    z0 = jnp.where(g == 1, x0, 1.0 - x0)
    z1 = jnp.where(g == 2, x1, 1.0 - x1)
    row_loss = -(jnp.maximum(jnp.log(z0), -100.0) +
                 jnp.maximum(jnp.log(z1), -100.0))          # (T, 128), summed over class
    valid = (g != 0).astype(jnp.float32)                    # (T, 128)
    row_loss = row_loss * valid

    # Sublane/lane-preserving partial reduction: (T,128) -> (8,128) via VALU adds
    # of whole vregs (no XLU, no scalarized RMW).
    t = row_loss.shape[0]
    s8 = row_loss.reshape(t // 8, 8, LANE).sum(axis=0)       # (8, 128)
    v8 = valid.reshape(t // 8, 8, LANE).sum(axis=0)          # (8, 128)

    num_ref[...] += s8.reshape(1, 8, LANE)
    den_ref[...] += v8.reshape(1, 8, LANE)


def gender_cls_loss(out, gt, *, rows_per_step=2048):
    """out: (N, 2) probs in [0,1]; gt: (N,) int labels in {0,1,2}. Returns scalar loss."""
    N, C = out.shape
    assert C == 2

    rows_per_step = max(SUBPACK, _round_up(rows_per_step, SUBPACK))
    rows_needed = _cdiv(N, LANE)

    if rows_needed <= rows_per_step:
        # Single tile covers everything; no point splitting across cores.
        num_splits = 1
        steps_per_split = 1
        tile_rows = _round_up(rows_needed, SUBPACK)
        rows_total = tile_rows
    else:
        tile_rows = rows_per_step
        num_splits = 2                      # v7x: one slice per TensorCore
        blocks = _round_up(_cdiv(rows_needed, tile_rows), num_splits)
        steps_per_split = blocks // num_splits
        rows_total = blocks * tile_rows

    n_pad = rows_total * LANE
    pad = n_pad - N

    # gt as int8 (values 0..2) to cut HBM traffic; padding rows are invalid (gt=0)
    # so they contribute nothing to numerator or denominator.
    gt_i8 = gt.astype(jnp.int8)
    out_p = out
    if pad:
        out_p = jnp.pad(out_p, ((0, pad), (0, 0)), constant_values=0.5)
        gt_i8 = jnp.pad(gt_i8, ((0, pad),), constant_values=0)

    # Lane/sublane-dense layout (pad + transpose + reshape fuse into one XLA copy).
    out3 = out_p.T.reshape(2, rows_total, LANE)     # keep producer dtype
    gt2 = gt_i8.reshape(rows_total, LANE)

    num_parts, den_parts = pl.pallas_call(
        _gender_cls_loss_kernel,
        out_shape=(
            jax.ShapeDtypeStruct((num_splits, 8, LANE), jnp.float32),
            jax.ShapeDtypeStruct((num_splits, 8, LANE), jnp.float32),
        ),
        grid=(num_splits, steps_per_split),
        in_specs=[
            pl.BlockSpec((2, tile_rows, LANE),
                         lambda c, j: (0, c * steps_per_split + j, 0)),
            pl.BlockSpec((tile_rows, LANE),
                         lambda c, j: (c * steps_per_split + j, 0)),
        ],
        out_specs=(
            pl.BlockSpec((1, 8, LANE), lambda c, j: (c, 0, 0)),
            pl.BlockSpec((1, 8, LANE), lambda c, j: (c, 0, 0)),
        ),
        compiler_params=pltpu.CompilerParams(
            dimension_semantics=("parallel", "arbitrary")),
    )(out3, gt2)

    # Tiny final reduction + divide in XLA (at most 2*8*128 floats per output).
    num_total = jnp.sum(num_parts)
    den_total = jnp.sum(den_parts)
    # NOTE: if no rows are valid, this returns NaN, matching PyTorch's mean over
    # an empty selection.
    return num_total / (den_total * 2.0)


def _reference(out, gt):
    # Pure-JAX mirror of the PyTorch module (two-log form with -100 clamp).
    valid = (gt != 0)
    y = jax.nn.one_hot(gt, 3, dtype=jnp.float32)[:, 1:]
    x = out.astype(jnp.float32)
    bce = -(y * jnp.maximum(jnp.log(x), -100.0)
            + (1.0 - y) * jnp.maximum(jnp.log(1.0 - x), -100.0))
    return jnp.sum(bce * valid[:, None].astype(jnp.float32)) / (jnp.sum(valid) * 2.0)


if __name__ == "__main__":
    key = jax.random.PRNGKey(0)
    k1, k2, k3, k4 = jax.random.split(key, 4)

    # Small shape: single-tile path.
    out_s = jax.nn.sigmoid(jax.random.normal(k1, (8, 2), dtype=jnp.float32))
    gt_s = jax.random.randint(k2, (8,), 0, 3, dtype=jnp.int32)
    gt_s = gt_s.at[0].set(1)  # guarantee at least one valid row (avoid NaN mean)
    loss_s = jax.block_until_ready(gender_cls_loss(out_s, gt_s))
    ref_s = _reference(out_s, gt_s)
    assert jnp.allclose(loss_s, ref_s, rtol=1e-5, atol=1e-6), (float(loss_s), float(ref_s))

    # Larger shape: exercises multi-step accumulation, the 2-way parallel split,
    # and row padding (rows_per_step shrunk so the test stays tiny).
    out_l = jax.nn.sigmoid(jax.random.normal(k3, (20000, 2), dtype=jnp.float32))
    gt_l = jax.random.randint(k4, (20000,), 0, 3, dtype=jnp.int32)
    loss_l = jax.block_until_ready(gender_cls_loss(out_l, gt_l, rows_per_step=32))
    ref_l = _reference(out_l, gt_l)
    assert jnp.allclose(loss_l, ref_l, rtol=1e-4, atol=1e-6), (float(loss_l), float(ref_l))

    print("KERNEL_OK")
</pallas_src>

<mosaic_0001>
module attributes {stable_mosaic.version = 11 : i64} {
  func.func @_gender_cls_loss_kernel(%arg0: i32, %arg1: i32, %arg2: memref<2x32x128xf32, #tpu.memory_space<vmem>>, %arg3: memref<32x128xi8, #tpu.memory_space<vmem>>, %arg4: memref<1x8x128xf32, #tpu.memory_space<vmem>>, %arg5: memref<1x8x128xf32, #tpu.memory_space<vmem>>) attributes {dimension_semantics = [#tpu.dimension_semantics<parallel>, #tpu.dimension_semantics<arbitrary>], iteration_bounds = array<i64: 1, 1>, scalar_prefetch = 0 : i64, scratch_operands = 0 : i64, tpu.core_type = #tpu.core_type<tc>, window_params = [{transform_indices = @transform_0, window_bounds = array<i64: 2, 32, 128>}, {transform_indices = @transform_1, window_bounds = array<i64: 32, 128>}, {transform_indices = @transform_2, window_bounds = array<i64: 1, 8, 128>}, {transform_indices = @transform_3, window_bounds = array<i64: 1, 8, 128>}]} {
    %c0_i32 = arith.constant 0 : i32
    %0 = arith.cmpi eq, %arg1, %c0_i32 : i32
    %1 = arith.extui %0 : i1 to i32
    %c0_i32_0 = arith.constant 0 : i32
    %2 = arith.cmpi ne, %1, %c0_i32_0 : i32
    scf.if %2 {
      %cst_26 = arith.constant 0.000000e+00 : f32
      %45 = vector.broadcast %cst_26 : f32 to vector<1x8x128xf32>
      %c0_27 = arith.constant 0 : index
      %c0_28 = arith.constant 0 : index
      %c0_29 = arith.constant 0 : index
      %46 = vector.load %arg4[%c0_27, %c0_28, %c0_29] : memref<1x8x128xf32, #tpu.memory_space<vmem>>, vector<1x8x128xf32>
      tpu.vector_store %arg4[%c0_27, %c0_28, %c0_29], %45 {strides = array<i32>} : memref<1x8x128xf32, #tpu.memory_space<vmem>>, vector<1x8x128xf32>,
      %cst_30 = arith.constant 0.000000e+00 : f32
      %47 = vector.broadcast %cst_30 : f32 to vector<1x8x128xf32>
      %c0_31 = arith.constant 0 : index
      %c0_32 = arith.constant 0 : index
      %c0_33 = arith.constant 0 : index
      %48 = vector.load %arg5[%c0_31, %c0_32, %c0_33] : memref<1x8x128xf32, #tpu.memory_space<vmem>>, vector<1x8x128xf32>
      tpu.vector_store %arg5[%c0_31, %c0_32, %c0_33], %47 {strides = array<i32>} : memref<1x8x128xf32, #tpu.memory_space<vmem>>, vector<1x8x128xf32>,
    } else {
    }
    %c0 = arith.constant 0 : index
    %c0_1 = arith.constant 0 : index
    %3 = vector.load %arg3[%c0, %c0_1] : memref<32x128xi8, #tpu.memory_space<vmem>>, vector<32x128xi8>
    %4 = arith.extsi %3 : vector<32x128xi8> to vector<32x128xi32>
    %c0_2 = arith.constant 0 : index
    %c0_3 = arith.constant 0 : index
    %c0_4 = arith.constant 0 : index
    %5 = vector.load %arg2[%c0_2, %c0_3, %c0_4] : memref<2x32x128xf32, #tpu.memory_space<vmem>>, vector<1x32x128xf32>
    %6 = vector.shape_cast %5 : vector<1x32x128xf32> to vector<32x128xf32>
    %c1 = arith.constant 1 : index
    %c0_5 = arith.constant 0 : index
    %c0_6 = arith.constant 0 : index
    %7 = vector.load %arg2[%c1, %c0_5, %c0_6] : memref<2x32x128xf32, #tpu.memory_space<vmem>>, vector<1x32x128xf32>
    %8 = vector.shape_cast %7 : vector<1x32x128xf32> to vector<32x128xf32>
    %c1_i32 = arith.constant 1 : i32
    %9 = vector.broadcast %c1_i32 : i32 to vector<32x128xi32>
    %10 = arith.cmpi eq, %4, %9 : vector<32x128xi32>
    %cst = arith.constant 1.000000e+00 : f32
    %11 = vector.broadcast %cst : f32 to vector<32x128xf32>
    %12 = arith.subf %11, %6 : vector<32x128xf32>
    %13 = arith.select %10, %6, %12 : vector<32x128xi1>, vector<32x128xf32>
    %c2_i32 = arith.constant 2 : i32
    %14 = vector.broadcast %c2_i32 : i32 to vector<32x128xi32>
    %15 = arith.cmpi eq, %4, %14 : vector<32x128xi32>
    %cst_7 = arith.constant 1.000000e+00 : f32
    %16 = vector.broadcast %cst_7 : f32 to vector<32x128xf32>
    %17 = arith.subf %16, %8 : vector<32x128xf32>
    %18 = arith.select %15, %8, %17 : vector<32x128xi1>, vector<32x128xf32>
    %19 = math.log %13 : vector<32x128xf32>
    %cst_8 = arith.constant -1.000000e+02 : f32
    %20 = vector.broadcast %cst_8 : f32 to vector<32x128xf32>
    %21 = arith.maximumf %19, %20 : vector<32x128xf32>
    %22 = math.log %18 : vector<32x128xf32>
    %cst_9 = arith.constant -1.000000e+02 : f32
    %23 = vector.broadcast %cst_9 : f32 to vector<32x128xf32>
    %24 = arith.maximumf %22, %23 : vector<32x128xf32>
    %25 = arith.addf %21, %24 : vector<32x128xf32>
    %cst_10 = arith.constant 0.000000e+00 : f32
    %26 = vector.broadcast %cst_10 : f32 to vector<32x128xf32>
    %27 = arith.subf %26, %25 : vector<32x128xf32>
    %c0_i32_11 = arith.constant 0 : i32
    %28 = vector.broadcast %c0_i32_11 : i32 to vector<32x128xi32>
    %29 = arith.cmpi ne, %4, %28 : vector<32x128xi32>
    %30 = arith.extui %29 : vector<32x128xi1> to vector<32x128xi32>
    %31 = arith.sitofp %30 : vector<32x128xi32> to vector<32x128xf32>
    %32 = arith.mulf %27, %31 : vector<32x128xf32>
    %33 = vector.shape_cast %32 : vector<32x128xf32> to vector<4x8x128xf32>
    %cst_12 = arith.constant dense<0.000000e+00> : vector<8x128xf32>
    %34 = vector.multi_reduction <add>, %33, %cst_12 [0] : vector<4x8x128xf32> to vector<8x128xf32>
    %35 = vector.shape_cast %31 : vector<32x128xf32> to vector<4x8x128xf32>
    %cst_13 = arith.constant dense<0.000000e+00> : vector<8x128xf32>
    %36 = vector.multi_reduction <add>, %35, %cst_13 [0] : vector<4x8x128xf32> to vector<8x128xf32>
    %c0_14 = arith.constant 0 : index
    %c0_15 = arith.constant 0 : index
    %c0_16 = arith.constant 0 : index
    %37 = vector.load %arg4[%c0_14, %c0_15, %c0_16] : memref<1x8x128xf32, #tpu.memory_space<vmem>>, vector<1x8x128xf32>
    %38 = vector.shape_cast %34 : vector<8x128xf32> to vector<1x8x128xf32>
    %39 = arith.addf %37, %38 : vector<1x8x128xf32>
    %c0_17 = arith.constant 0 : index
    %c0_18 = arith.constant 0 : index
    %c0_19 = arith.constant 0 : index
    %40 = vector.load %arg4[%c0_17, %c0_18, %c0_19] : memref<1x8x128xf32, #tpu.memory_space<vmem>>, vector<1x8x128xf32>
    tpu.vector_store %arg4[%c0_17, %c0_18, %c0_19], %39 {strides = array<i32>} : memref<1x8x128xf32, #tpu.memory_space<vmem>>, vector<1x8x128xf32>,
    %c0_20 = arith.constant 0 : index
    %c0_21 = arith.constant 0 : index
    %c0_22 = arith.constant 0 : index
    %41 = vector.load %arg5[%c0_20, %c0_21, %c0_22] : memref<1x8x128xf32, #tpu.memory_space<vmem>>, vector<1x8x128xf32>
    %42 = vector.shape_cast %36 : vector<8x128xf32> to vector<1x8x128xf32>
    %43 = arith.addf %41, %42 : vector<1x8x128xf32>
    %c0_23 = arith.constant 0 : index
    %c0_24 = arith.constant 0 : index
    %c0_25 = arith.constant 0 : index
    %44 = vector.load %arg5[%c0_23, %c0_24, %c0_25] : memref<1x8x128xf32, #tpu.memory_space<vmem>>, vector<1x8x128xf32>
    tpu.vector_store %arg5[%c0_23, %c0_24, %c0_25], %43 {strides = array<i32>} : memref<1x8x128xf32, #tpu.memory_space<vmem>>, vector<1x8x128xf32>,
    return
  }
  func.func @transform_0(%arg0: i32, %arg1: i32) -> (i32, i32, i32) {
    %c1_i32 = arith.constant 1 : i32
    %0 = arith.muli %arg0, %c1_i32 : i32
    %1 = arith.addi %0, %arg1 : i32
    %c0_i32 = arith.constant 0 : i32
    %c0_i32_0 = arith.constant 0 : i32
    %c0_i32_1 = arith.constant 0 : i32
    return %c0_i32, %1, %c0_i32_0 : i32, i32, i32
  }
  func.func @transform_1(%arg0: i32, %arg1: i32) -> (i32, i32) {
    %c1_i32 = arith.constant 1 : i32
    %0 = arith.muli %arg0, %c1_i32 : i32
    %1 = arith.addi %0, %arg1 : i32
    %c0_i32 = arith.constant 0 : i32
    %c0_i32_0 = arith.constant 0 : i32
    return %1, %c0_i32 : i32, i32
  }
  func.func @transform_2(%arg0: i32, %arg1: i32) -> (i32, i32, i32) {
    %c0_i32 = arith.constant 0 : i32
    %c0_i32_0 = arith.constant 0 : i32
    %c0_i32_1 = arith.constant 0 : i32
    return %arg0, %c0_i32, %c0_i32_0 : i32, i32, i32
  }
  func.func @transform_3(%arg0: i32, %arg1: i32) -> (i32, i32, i32) {
    %c0_i32 = arith.constant 0 : i32
    %c0_i32_0 = arith.constant 0 : i32
    %c0_i32_1 = arith.constant 0 : i32
    return %arg0, %c0_i32, %c0_i32_0 : i32, i32, i32
  }
}

</mosaic_0001>

<llo_original>
// kernel: tpu_custom_call.1
$region0: #{tpu_custom_call.1}
  #allocation0 [shape = 'u32[]', space=smem, size = 0x4, offset = 0x4, fixed_abs, tag = 'smem constant byte address 0x4 - core index']
  #allocation1 [shape = 'u32[144,128]{1,0:T(1,128)}', space=vmem, size = 0x12000, scoped, tag = 'internal scratch']
  %s0 = inlined_call_operand.hbm [shape: f32[2,32,128], index: 0, kind: input, shape index: {}]
  %s1 = inlined_call_operand.hbm [shape: s8[32,128], index: 1, kind: input, shape index: {}]
  %s2 = inlined_call_operand.hbm [shape: f32[1,8,128], index: 2, kind: output, shape index: {0}]
  %s3 = inlined_call_operand.hbm [shape: f32[1,8,128], index: 3, kind: output, shape index: {1}]
  %4 = xla_tuple %s2, %s3
  %s5 = sld [smem:[#allocation0]]
  $region38: #{tpu_custom_call.1} parent=0
    _
  %s7 = ssub.s32 1, %s5
  %s8 = scalar_select 0, %s7, %s5
  $region1: #{tpu_custom_call.1} parent=0
    #allocation2 [shape = 'u8[32768]{0}', space=vmem, size = 0x8000, scoped, tag = 'input window, operand 0, single buffered']
    #allocation3 [shape = 's32[1]{0}', space=sflag, size = 0x4, scoped, tag = 'scoped memory for tpu_custom_call.1']
    #allocation4 [shape = 's32[1]{0}', space=sflag, size = 0x4, scoped, tag = 'scoped memory for tpu_custom_call.1']
    #allocation5 [shape = 'u8[4096]{0}', space=vmem, size = 0x1000, scoped, tag = 'input window, operand 1, single buffered']
    #allocation6 [shape = 's32[1]{0}', space=sflag, size = 0x4, scoped, tag = 'scoped memory for tpu_custom_call.1']
    #allocation7 [shape = 'u8[4096]{0}', space=vmem, size = 0x1000, scoped, tag = 'output window, operand 0, single buffered']
    #allocation8 [shape = 'u8[4096]{0}', space=vmem, size = 0x1000, scoped, tag = 'output window, operand 1, single buffered']
    #allocation9 [shape = 's32[1]{0}', space=sflag, size = 0x4, scoped, tag = 'scoped memory for tpu_custom_call.1']
    %9 = vsyncpa [#allocation3], 0
    %10 = vsyncpa [#allocation6], 0
    %11 = vsyncpa [#allocation4], 0
    %12 = vsyncpa [#allocation9], 0
    // Predicated region
    $region2: #{tpu_custom_call.1} parent=1 // pred_check
      _
    $region3: #{tpu_custom_call.1} parent=1 // pred_check_branch
      %14 = sbr.rel (0) target = $region5
    $region4: #{tpu_custom_call.1} parent=1 // pred_region
      %s15 = sadd.s32 0, 0
      %s16 = smul.u32 4, %s15
      %s18 = ssub.s32 1024, 1024
      %19 = vsyncadd [#allocation3], %s18
      %s20 = smul.addr %s16, 128
      %s21 = scalar_lea.hbm %s0, %s20
      %s22 = sshll.u32 [#allocation2], 4
      %s23 = int_to_ptr.vmem [resolvable:$true] %s22
      %28 = dma.hbm_to_vmem [thread:$0]  %s21, 1024, %s23, [#allocation3], 128, 128, 8
    $region5: #{tpu_custom_call.1} parent=1 // pred_fallthru
      _
    // Predicated region
    $region6: #{tpu_custom_call.1} parent=1 // pred_check
      _
    $region7: #{tpu_custom_call.1} parent=1 // pred_check_branch
      %30 = sbr.rel (0) target = $region9
    $region8: #{tpu_custom_call.1} parent=1 // pred_region
      %s31 = sadd.s32 0, 0
      %s33 = ssub.s32 128, 128
      %34 = vsyncadd [#allocation6], %s33
      %s35 = smul.addr %s31, 128
      %s36 = scalar_lea.hbm %s1, %s35
      %s38 = sshll.u32 [#allocation5], 4
      %s39 = int_to_ptr.vmem [resolvable:$true] %s38
      %41 = dma.hbm_to_vmem [thread:$0]  %s36, 128, %s39, [#allocation6]
    $region9: #{tpu_custom_call.1} parent=1 // pred_fallthru
      _
    // Predicated region
    $region10: #{tpu_custom_call.1} parent=1 // pred_check
      _
    $region11: #{tpu_custom_call.1} parent=1 // pred_check_branch
      %43 = sbr.rel (0) target = $region13
    $region12: #{tpu_custom_call.1} parent=1 // pred_region
      %44 = dma.done [#allocation3], 1024
    $region13: #{tpu_custom_call.1} parent=1 // pred_fallthru
      _
    // Predicated region
    $region14: #{tpu_custom_call.1} parent=1 // pred_check
      _
    $region15: #{tpu_custom_call.1} parent=1 // pred_check_branch
      %46 = sbr.rel (0) target = $region17
    $region16: #{tpu_custom_call.1} parent=1 // pred_region
      %47 = dma.done [#allocation6], 128
    $region17: #{tpu_custom_call.1} parent=1 // pred_fallthru
      _
    %s48 = sadd.s32 0, 0
    %s49 = smul.u32 4, %s48
    %s50 = sadd.s32 0, 0
    %p51 = scmp.eq.s32.totalorder 0, 0
    // Predicated region
    $region18: #{tpu_custom_call.1} parent=1 // pred_check
      %p52 = pneg %p51
    $region19: #{tpu_custom_call.1} parent=1 // pred_check_branch
      %54 = sbr.rel (%p52) target = $region21
    $region20: #{tpu_custom_call.1} parent=1 // pred_region
      %55 = vst [vmem:[#allocation7] sm:$0xff] 0.0
      %56 = vst [vmem:[#allocation8] sm:$0xff] 0.0
    $region21: #{tpu_custom_call.1} parent=1 // pred_fallthru
      _
    %v57 = vld [vmem:[#allocation5] sm:$0xff]
    %v58 = vunpack.c.0.s8 %v57
    %v59 = vunpack.c.1.s8 %v57
    %v60 = vunpack.c.2.s8 %v57
    %v61 = vunpack.c.3.s8 %v57
    %v62 = vld [vmem:[#allocation2] sm:$0xff]
    %v63 = vld [vmem:[#allocation2 + $0x8] sm:$0xff]
    %v64 = vld [vmem:[#allocation2 + $0x10] sm:$0xff]
    %v65 = vld [vmem:[#allocation2 + $0x18] sm:$0xff]
    %s66 = scalar_lea.vmem [#allocation2], 32
    %v67 = vld [vmem:[%s66] sm:$0xff]
    %v68 = vld [vmem:[%s66 + $0x8] sm:$0xff]
    %v69 = vld [vmem:[%s66 + $0x10] sm:$0xff]
    %v70 = vld [vmem:[%s66 + $0x18] sm:$0xff]
    %vm71 = vcmp.eq.s32.totalorder %v58, 1
    %vm72 = vcmp.eq.s32.totalorder %v59, 1
    %vm73 = vcmp.eq.s32.totalorder %v60, 1
    %vm74 = vcmp.eq.s32.totalorder %v61, 1
    %v75 = vsub.f32 1.0, %v62
    %v76 = vsub.f32 1.0, %v63
    %v77 = vsub.f32 1.0, %v64
    %v78 = vsub.f32 1.0, %v65
    %v79 = vsel %vm71, %v62, %v75
    %v80 = vsel %vm72, %v63, %v76
    %v81 = vsel %vm73, %v64, %v77
    %v82 = vsel %vm74, %v65, %v78
    %vm83 = vcmp.eq.s32.totalorder %v58, 2
    %vm84 = vcmp.eq.s32.totalorder %v59, 2
    %vm85 = vcmp.eq.s32.totalorder %v60, 2
    %vm86 = vcmp.eq.s32.totalorder %v61, 2
    %v87 = vsub.f32 1.0, %v67
    %v88 = vsub.f32 1.0, %v68
    %v89 = vsub.f32 1.0, %v69
    %v90 = vsub.f32 1.0, %v70
    %v91 = vsel %vm83, %v67, %v87
    %v92 = vsel %vm84, %v68, %v88
    %v93 = vsel %vm85, %v69, %v89
    %v94 = vsel %vm86, %v70, %v90
    %v95 = vlog2.pop %v79
    %v96 = vmul.f32 %v95, 0.6931472
    %v97 = vlog2.pop %v80
    %v98 = vmul.f32 %v97, 0.6931472
    %v99 = vlog2.pop %v81
    %v100 = vmul.f32 %v99, 0.6931472
    %v101 = vlog2.pop %v82
    %v102 = vmul.f32 %v101, 0.6931472
    %v103 = vmax.f32 %v96, -100.0
    %v104 = vmax.f32 %v98, -100.0
    %v105 = vmax.f32 %v100, -100.0
    %v106 = vmax.f32 %v102, -100.0
    %v107 = vlog2.pop %v91
    %v108 = vmul.f32 %v107, 0.6931472
    %v109 = vlog2.pop %v92
    %v110 = vmul.f32 %v109, 0.6931472
    %v111 = vlog2.pop %v93
    %v112 = vmul.f32 %v111, 0.6931472
    %v113 = vlog2.pop %v94
    %v114 = vmul.f32 %v113, 0.6931472
    %v115 = vmax.f32 %v108, -100.0
    %v116 = vmax.f32 %v110, -100.0
    %v117 = vmax.f32 %v112, -100.0
    %v118 = vmax.f32 %v114, -100.0
    %v119 = vadd.f32 %v103, %v115
    %v120 = vadd.f32 %v104, %v116
    %v121 = vadd.f32 %v105, %v117
    %v122 = vadd.f32 %v106, %v118
    %v123 = vsub.f32 0.0, %v119
    %v124 = vsub.f32 0.0, %v120
    %v125 = vsub.f32 0.0, %v121
    %v126 = vsub.f32 0.0, %v122
    %vm127 = vcmp.ne.s32.totalorder %v58, 0
    %vm128 = vcmp.ne.s32.totalorder %v59, 0
    %vm129 = vcmp.ne.s32.totalorder %v60, 0
    %vm130 = vcmp.ne.s32.totalorder %v61, 0
    %v131 = vsel %vm127, 1, 0
    %v132 = vsel %vm128, 1, 0
    %v133 = vsel %vm129, 1, 0
    %v134 = vsel %vm130, 1, 0
    %v135 = vcvt.s32.f32 %v131
    %v136 = vcvt.s32.f32 %v132
    %v137 = vcvt.s32.f32 %v133
    %v138 = vcvt.s32.f32 %v134
    %v139 = vmul.f32 %v123, %v135
    %v140 = vmul.f32 %v124, %v136
    %v141 = vmul.f32 %v125, %v137
    %v142 = vmul.f32 %v126, %v138
    %v143 = vadd.f32 %v139, %v140
    %v144 = vadd.f32 %v143, %v141
    %v145 = vadd.f32 %v144, %v142
    %v146 = vadd.f32 %v135, %v136
    %v147 = vadd.f32 %v146, %v137
    %v148 = vadd.f32 %v147, %v138
    %v149 = vld [vmem:[#allocation7] sm:$0xff]
    %v150 = vadd.f32 %v149, %v145
    %151 = vst [vmem:[#allocation7] sm:$0xff] %v150
    %v152 = vld [vmem:[#allocation8] sm:$0xff]
    %v153 = vadd.f32 %v152, %v148
    %154 = vst [vmem:[#allocation8] sm:$0xff] %v153
    // Predicated region
    $region22: #{tpu_custom_call.1} parent=1 // pred_check
      _
    $region23: #{tpu_custom_call.1} parent=1 // pred_check_branch
      %156 = sbr.rel (0) target = $region25
    $region24: #{tpu_custom_call.1} parent=1 // pred_region
      %s158 = ssub.s32 128, 128
      %159 = vsyncadd [#allocation4], %s158
      %s161 = sshll.u32 [#allocation7], 4
      %s162 = int_to_ptr.vmem [resolvable:$true] %s161
      %164 = dma.vmem_to_hbm [thread:$0]  %s162, 128, %s2, [#allocation4]
    $region25: #{tpu_custom_call.1} parent=1 // pred_fallthru
      _
    // Predicated region
    $region26: #{tpu_custom_call.1} parent=1 // pred_check
      _
    $region27: #{tpu_custom_call.1} parent=1 // pred_check_branch
      %166 = sbr.rel (0) target = $region29
    $region28: #{tpu_custom_call.1} parent=1 // pred_region
      %s168 = ssub.s32 128, 128
      %169 = vsyncadd [#allocation9], %s168
      %s171 = sshll.u32 [#allocation8], 4
      %s172 = int_to_ptr.vmem [resolvable:$true] %s171
      %174 = dma.vmem_to_hbm [thread:$0]  %s172, 128, %s3, [#allocation9]
    $region29: #{tpu_custom_call.1} parent=1 // pred_fallthru
      _
    // Predicated region
    $region30: #{tpu_custom_call.1} parent=1 // pred_check
      _
    $region31: #{tpu_custom_call.1} parent=1 // pred_check_branch
      %176 = sbr.rel (0) target = $region33
    $region32: #{tpu_custom_call.1} parent=1 // pred_region
      %177 = dma.done [#allocation4], 128
    $region33: #{tpu_custom_call.1} parent=1 // pred_fallthru
      _
    // Predicated region
    $region34: #{tpu_custom_call.1} parent=1 // pred_check
      _
    $region35: #{tpu_custom_call.1} parent=1 // pred_check_branch
      %179 = sbr.rel (0) target = $region37
    $region36: #{tpu_custom_call.1} parent=1 // pred_region
      %180 = dma.done [#allocation9], 128
    $region37: #{tpu_custom_call.1} parent=1 // pred_fallthru
      _
    %181 = vsyncpa [#allocation3], 1
    %182 = vsyncpa [#allocation6], 1
    %183 = vsyncpa [#allocation4], 1
    %184 = vsyncpa [#allocation9], 1

</llo_original>
